<compile_context>
chip_gen: v7x
topology: tpu7x:2x2x1
jax: 0.10.0
libtpu: 0.0.40
codegen_flags: <defaults>
</compile_context>

<pallas_src>
import functools

import jax
import jax.numpy as jnp
from jax.experimental import pallas as pl
from jax.experimental.pallas import tpu as pltpu


def _round_up(v, m):
    return ((v + m - 1) // m) * m


def _patch_embed_matmul_kernel(a_ref, w_ref, b_ref, o_ref, acc_ref):
    # a_ref: (tm, tk) patches tile, w_ref: (tk, tn) weight tile,
    # b_ref: (1, tn) bias tile, o_ref: (tm, tn) output tile,
    # acc_ref: (tm, tn) f32 accumulator scratch (persists across the k axis).
    k = pl.program_id(2)

    @pl.when(k == 0)
    def _():
        acc_ref[...] = jnp.zeros_like(acc_ref)

    acc_ref[...] += jnp.dot(a_ref[...], w_ref[...],
                            preferred_element_type=jnp.float32)

    @pl.when(k == pl.num_programs(2) - 1)
    def _():
        o_ref[...] = (acc_ref[...] + b_ref[...].astype(jnp.float32)).astype(o_ref.dtype)


def patch_embed_pallas(x, weight, bias, patch_size, *, tm=256, tn=256, tk=512):
    """x: (B, C, H, W); weight: (E, C, P, P) conv weight; bias: (E,).

    Returns (B, num_patches, E), identical to
    Conv2d(C, E, kernel_size=P, stride=P)(x).flatten(2).transpose(1, 2).
    """
    B, C, H, W = x.shape
    E = weight.shape[0]
    P = int(patch_size)
    assert H % P == 0 and W % P == 0, "image size must be divisible by patch size"
    gh, gw = H // P, W // P
    num_patches = gh * gw

    # ---- layout plumbing (wrapper, not kernel) -----------------------------
    # (B, C, gh, P, gw, P) -> (B, gh, gw, C, P, P) -> (B*num_patches, C*P*P)
    patches = x.reshape(B, C, gh, P, gw, P).transpose(0, 2, 4, 1, 3, 5)
    patches = patches.reshape(B * num_patches, C * P * P)
    # Conv weight (E, C, P, P) -> (C*P*P, E); same (c, ph, pw) flattening order.
    w2d = weight.reshape(E, C * P * P).T

    M, K = patches.shape
    N = E

    # ---- tile selection: big, lane-dense blocks; pad small problems --------
    tm = min(tm, _round_up(M, 8))
    tn = min(tn, _round_up(N, 128))
    tk = min(tk, _round_up(K, 128))
    Mp, Kp, Np = _round_up(M, tm), _round_up(K, tk), _round_up(N, tn)

    a = patches if (Mp == M and Kp == K) else jnp.pad(patches, ((0, Mp - M), (0, Kp - K)))
    w = w2d if (Kp == K and Np == N) else jnp.pad(w2d, ((0, Kp - K), (0, Np - N)))
    b = bias if Np == N else jnp.pad(bias, (0, Np - N))
    b = b.reshape(1, Np).astype(jnp.float32)

    out = pl.pallas_call(
        _patch_embed_matmul_kernel,
        out_shape=jax.ShapeDtypeStruct((Mp, Np), x.dtype),
        grid_spec=pltpu.PrefetchScalarGridSpec(
            num_scalar_prefetch=0,
            grid=(Mp // tm, Np // tn, Kp // tk),
            in_specs=[
                pl.BlockSpec((tm, tk), lambda i, j, k: (i, k)),   # patches
                pl.BlockSpec((tk, tn), lambda i, j, k: (k, j)),   # weight
                pl.BlockSpec((1, tn), lambda i, j, k: (0, j)),    # bias
            ],
            out_specs=pl.BlockSpec((tm, tn), lambda i, j, k: (i, j)),
            scratch_shapes=[pltpu.VMEM((tm, tn), jnp.float32)],
        ),
        compiler_params=pltpu.CompilerParams(
            dimension_semantics=("parallel", "parallel", "arbitrary")),
    )(a, w, b)

    out = out[:M, :N]
    return out.reshape(B, num_patches, E)


def _to_2tuple(v):
    return tuple(v) if isinstance(v, (tuple, list)) else (v, v)


class PatchEmbed:
    """JAX/Pallas port of the PyTorch PatchEmbed module (image -> patch embedding)."""

    def __init__(self, img_size=224, patch_size=16, in_chans=3, embed_dim=768, *, key=None):
        img_size = _to_2tuple(img_size)
        patch_size = _to_2tuple(patch_size)
        self.img_size = img_size
        self.patch_size = patch_size
        self.patch_shape = (img_size[0] // patch_size[0], img_size[1] // patch_size[1])
        self.num_patches = self.patch_shape[0] * self.patch_shape[1]
        self.in_chans = in_chans
        self.embed_dim = embed_dim

        if key is None:
            key = jax.random.PRNGKey(0)
        kw, kb = jax.random.split(key)
        fan_in = in_chans * patch_size[0] * patch_size[1]
        bound = 1.0 / (fan_in ** 0.5)
        # Conv2d-style init (uniform in [-1/sqrt(fan_in), 1/sqrt(fan_in)]).
        self.weight = jax.random.uniform(
            kw, (embed_dim, in_chans, patch_size[0], patch_size[1]),
            dtype=jnp.float32, minval=-bound, maxval=bound)
        self.bias = jax.random.uniform(
            kb, (embed_dim,), dtype=jnp.float32, minval=-bound, maxval=bound)

    def __call__(self, x, **kwargs):
        B, C, H, W = x.shape
        assert H == self.img_size[0] and W == self.img_size[1], (
            f"Input image size ({H}*{W}) doesn't match model "
            f"({self.img_size[0]}*{self.img_size[1]}).")
        return patch_embed_pallas(x, self.weight, self.bias, self.patch_size[0])


def _reference_patch_embed(x, weight, bias, patch_size):
    """Pure-JAX reference: real strided conv, then flatten(2).transpose(1,2)."""
    y = jax.lax.conv_general_dilated(
        x.astype(jnp.float32), weight.astype(jnp.float32),
        window_strides=(patch_size, patch_size), padding="VALID",
        dimension_numbers=("NCHW", "OIHW", "NCHW"))
    y = y + bias.reshape(1, -1, 1, 1)
    B, E, gh, gw = y.shape
    return y.reshape(B, E, gh * gw).transpose(0, 2, 1).astype(x.dtype)


if __name__ == "__main__":
    key = jax.random.PRNGKey(0)
    kx, kmod = jax.random.split(key)

    # Small shapes consistent with the module: B=2, C=4, 16x16 image, 4x4 patches,
    # embed_dim=32 -> num_patches (seq) = 16.
    B, C, H, W = 2, 4, 16, 16
    patch_size, embed_dim = 4, 32

    x = jax.random.normal(kx, (B, C, H, W), dtype=jnp.float32)

    module = PatchEmbed(img_size=H, patch_size=patch_size,
                        in_chans=C, embed_dim=embed_dim, key=kmod)

    out = jax.block_until_ready(module(x))
    ref = _reference_patch_embed(x, module.weight, module.bias, patch_size)

    assert out.shape == (B, module.num_patches, embed_dim), out.shape
    assert out.dtype == x.dtype
    assert jnp.allclose(out, ref, atol=1e-5, rtol=1e-5), (
        float(jnp.max(jnp.abs(out - ref))))

    print("KERNEL_OK")
</pallas_src>

<mosaic_0001>
module attributes {stable_mosaic.version = 11 : i64} {
  func.func @_patch_embed_matmul_kernel(%arg0: i32, %arg1: i32, %arg2: i32, %arg3: memref<32x128xf32, #tpu.memory_space<vmem>>, %arg4: memref<128x128xf32, #tpu.memory_space<vmem>>, %arg5: memref<1x128xf32, #tpu.memory_space<vmem>>, %arg6: memref<32x128xf32, #tpu.memory_space<vmem>>, %arg7: memref<32x128xf32, #tpu.memory_space<vmem>>) attributes {dimension_semantics = [#tpu.dimension_semantics<parallel>, #tpu.dimension_semantics<parallel>, #tpu.dimension_semantics<arbitrary>], iteration_bounds = array<i64: 1, 1, 1>, scalar_prefetch = 0 : i64, scratch_operands = 1 : i64, tpu.core_type = #tpu.core_type<tc>, window_params = [{transform_indices = @transform_0, window_bounds = array<i64: 32, 128>}, {transform_indices = @transform_1, window_bounds = array<i64: 128, 128>}, {transform_indices = @transform_2, window_bounds = array<i64: 1, 128>}, {transform_indices = @transform_3, window_bounds = array<i64: 32, 128>}]} {
    %c0_i32 = arith.constant 0 : i32
    %0 = arith.cmpi eq, %arg2, %c0_i32 : i32
    %1 = arith.extui %0 : i1 to i32
    %c0_i32_0 = arith.constant 0 : i32
    %2 = arith.cmpi ne, %1, %c0_i32_0 : i32
    scf.if %2 {
      %cst_10 = arith.constant 0.000000e+00 : f32
      %12 = vector.broadcast %cst_10 : f32 to vector<32x128xf32>
      %c0_11 = arith.constant 0 : index
      %c0_12 = arith.constant 0 : index
      %13 = vector.load %arg7[%c0_11, %c0_12] : memref<32x128xf32, #tpu.memory_space<vmem>>, vector<32x128xf32>
      tpu.vector_store %arg7[%c0_11, %c0_12], %12 {strides = array<i32>} : memref<32x128xf32, #tpu.memory_space<vmem>>, vector<32x128xf32>,
    } else {
    }
    %c0 = arith.constant 0 : index
    %c0_1 = arith.constant 0 : index
    %3 = vector.load %arg7[%c0, %c0_1] : memref<32x128xf32, #tpu.memory_space<vmem>>, vector<32x128xf32>
    %c0_2 = arith.constant 0 : index
    %c0_3 = arith.constant 0 : index
    %4 = vector.load %arg3[%c0_2, %c0_3] : memref<32x128xf32, #tpu.memory_space<vmem>>, vector<32x128xf32>
    %c0_4 = arith.constant 0 : index
    %c0_5 = arith.constant 0 : index
    %5 = vector.load %arg4[%c0_4, %c0_5] : memref<128x128xf32, #tpu.memory_space<vmem>>, vector<128x128xf32>
    %cst = arith.constant dense<0.000000e+00> : vector<32x128xf32>
    %6 = tpu.matmul %4, %5, %cst {dimension_numbers = #tpu.dot_dimension_numbers<[1], [0], [0], [1], [0, 0, 1, 1], [], []>} : vector<32x128xf32>, vector<128x128xf32>, vector<32x128xf32> -> vector<32x128xf32>
    %7 = arith.addf %3, %6 : vector<32x128xf32>
    %c0_6 = arith.constant 0 : index
    %c0_7 = arith.constant 0 : index
    %8 = vector.load %arg7[%c0_6, %c0_7] : memref<32x128xf32, #tpu.memory_space<vmem>>, vector<32x128xf32>
    tpu.vector_store %arg7[%c0_6, %c0_7], %7 {strides = array<i32>} : memref<32x128xf32, #tpu.memory_space<vmem>>, vector<32x128xf32>,
    %c0_i32_8 = arith.constant 0 : i32
    %9 = arith.cmpi eq, %arg2, %c0_i32_8 : i32
    %10 = arith.extui %9 : i1 to i32
    %c0_i32_9 = arith.constant 0 : i32
    %11 = arith.cmpi ne, %10, %c0_i32_9 : i32
    scf.if %11 {
      %c0_10 = arith.constant 0 : index
      %c0_11 = arith.constant 0 : index
      %12 = vector.load %arg7[%c0_10, %c0_11] : memref<32x128xf32, #tpu.memory_space<vmem>>, vector<32x128xf32>
      %c0_12 = arith.constant 0 : index
      %c0_13 = arith.constant 0 : index
      %13 = vector.load %arg5[%c0_12, %c0_13] : memref<1x128xf32, #tpu.memory_space<vmem>>, vector<1x128xf32>
      %14 = vector.broadcast %13 : vector<1x128xf32> to vector<32x128xf32>
      %15 = arith.addf %12, %14 : vector<32x128xf32>
      %c0_14 = arith.constant 0 : index
      %c0_15 = arith.constant 0 : index
      %16 = vector.load %arg6[%c0_14, %c0_15] : memref<32x128xf32, #tpu.memory_space<vmem>>, vector<32x128xf32>
      tpu.vector_store %arg6[%c0_14, %c0_15], %15 {strides = array<i32>} : memref<32x128xf32, #tpu.memory_space<vmem>>, vector<32x128xf32>,
    } else {
    }
    return
  }
  func.func @transform_0(%arg0: i32, %arg1: i32, %arg2: i32) -> (i32, i32) {
    %c0_i32 = arith.constant 0 : i32
    return %arg0, %arg2 : i32, i32
  }
  func.func @transform_1(%arg0: i32, %arg1: i32, %arg2: i32) -> (i32, i32) {
    %c0_i32 = arith.constant 0 : i32
    return %arg2, %arg1 : i32, i32
  }
  func.func @transform_2(%arg0: i32, %arg1: i32, %arg2: i32) -> (i32, i32) {
    %c0_i32 = arith.constant 0 : i32
    %c0_i32_0 = arith.constant 0 : i32
    return %c0_i32, %arg1 : i32, i32
  }
  func.func @transform_3(%arg0: i32, %arg1: i32, %arg2: i32) -> (i32, i32) {
    %c0_i32 = arith.constant 0 : i32
    return %arg0, %arg1 : i32, i32
  }
}

</mosaic_0001>

<llo_original>
// kernel: tpu_custom_call.1
$region0: #{tpu_custom_call.1}
  #allocation0 [shape = 'u32[]', space=smem, size = 0x4, offset = 0x4, fixed_abs, tag = 'smem constant byte address 0x4 - core index']
  #allocation1 [shape = 'u32[144,128]{1,0:T(1,128)}', space=vmem, size = 0x12000, scoped, tag = 'internal scratch']
  #allocation2 [shape = 'f32[32,128]{1,0:T(8,128)}', space=vmem, size = 0x4000, scoped, tag = 'scratch operand']
  %s0 = inlined_call_operand.hbm [shape: f32[32,128], index: 0, kind: input, shape index: {}]
  %s1 = inlined_call_operand.hbm [shape: f32[128,128], index: 1, kind: input, shape index: {}]
  %s2 = inlined_call_operand.vmem [shape: f32[1,128], index: 2, kind: input, shape index: {}]
  %s3 = inlined_call_operand.hbm [shape: f32[32,128], index: 3, kind: output, shape index: {}]
  %s4 = sld [smem:[#allocation0]]
  $region38: #{tpu_custom_call.1} parent=0
    _
  %s6 = ssub.s32 1, %s4
  %s7 = scalar_select 0, %s6, %s4
  $region1: #{tpu_custom_call.1} parent=0
    #allocation3 [shape = 'u8[16384]{0}', space=vmem, size = 0x4000, scoped, tag = 'input window, operand 0, single buffered']
    #allocation4 [shape = 's32[1]{0}', space=sflag, size = 0x4, scoped, tag = 'scoped memory for tpu_custom_call.1']
    #allocation5 [shape = 's32[1]{0}', space=sflag, size = 0x4, scoped, tag = 'scoped memory for tpu_custom_call.1']
    #allocation6 [shape = 'u8[65536]{0}', space=vmem, size = 0x10000, scoped, tag = 'input window, operand 1, single buffered']
    #allocation7 [shape = 's32[1]{0}', space=sflag, size = 0x4, scoped, tag = 'scoped memory for tpu_custom_call.1']
    #allocation8 [shape = 'u8[16384]{0}', space=vmem, size = 0x4000, scoped, tag = 'output window, operand 0, single buffered']
    %8 = vsyncpa [#allocation4], 0
    %9 = vsyncpa [#allocation7], 0
    %10 = vsyncpa [#allocation5], 0
    // Predicated region
    $region2: #{tpu_custom_call.1} parent=1 // pred_check
      _
    $region3: #{tpu_custom_call.1} parent=1 // pred_check_branch
      %12 = sbr.rel (0) target = $region5
    $region4: #{tpu_custom_call.1} parent=1 // pred_region
      %s14 = ssub.s32 512, 512
      %15 = vsyncadd [#allocation4], %s14
      %s16 = sshll.u32 [#allocation3], 4
      %s17 = int_to_ptr.vmem [resolvable:$true] %s16
      %22 = dma.hbm_to_vmem [thread:$0]  %s0, 512, %s17, [#allocation4], 128, 128, 8
    $region5: #{tpu_custom_call.1} parent=1 // pred_fallthru
      _
    // Predicated region
    $region6: #{tpu_custom_call.1} parent=1 // pred_check
      _
    $region7: #{tpu_custom_call.1} parent=1 // pred_check_branch
      %24 = sbr.rel (0) target = $region9
    $region8: #{tpu_custom_call.1} parent=1 // pred_region
      %s26 = ssub.s32 2048, 2048
      %27 = vsyncadd [#allocation7], %s26
      %s28 = sshll.u32 [#allocation6], 4
      %s29 = int_to_ptr.vmem [resolvable:$true] %s28
      %34 = dma.hbm_to_vmem [thread:$0]  %s1, 2048, %s29, [#allocation7], 128, 128, 8
    $region9: #{tpu_custom_call.1} parent=1 // pred_fallthru
      _
    // Predicated region
    $region10: #{tpu_custom_call.1} parent=1 // pred_check
      _
    $region11: #{tpu_custom_call.1} parent=1 // pred_check_branch
      %36 = sbr.rel (0) target = $region13
    $region12: #{tpu_custom_call.1} parent=1 // pred_region
      _
    $region13: #{tpu_custom_call.1} parent=1 // pred_fallthru
      _
    // Predicated region
    $region14: #{tpu_custom_call.1} parent=1 // pred_check
      _
    $region15: #{tpu_custom_call.1} parent=1 // pred_check_branch
      %38 = sbr.rel (0) target = $region17
    $region16: #{tpu_custom_call.1} parent=1 // pred_region
      %39 = dma.done [#allocation4], 512
    $region17: #{tpu_custom_call.1} parent=1 // pred_fallthru
      _
    // Predicated region
    $region18: #{tpu_custom_call.1} parent=1 // pred_check
      _
    $region19: #{tpu_custom_call.1} parent=1 // pred_check_branch
      %41 = sbr.rel (0) target = $region21
    $region20: #{tpu_custom_call.1} parent=1 // pred_region
      %42 = dma.done [#allocation7], 2048
    $region21: #{tpu_custom_call.1} parent=1 // pred_fallthru
      _
    %p43 = scmp.eq.s32.totalorder 0, 0
    // Predicated region
    $region22: #{tpu_custom_call.1} parent=1 // pred_check
      %p44 = pneg %p43
    $region23: #{tpu_custom_call.1} parent=1 // pred_check_branch
      %46 = sbr.rel (%p44) target = $region25
    $region24: #{tpu_custom_call.1} parent=1 // pred_region
      %47 = vst [vmem:[#allocation2] sm:$0xff] 0.0
      %48 = vst [vmem:[#allocation2 + $0x8] sm:$0xff] 0.0
      %49 = vst [vmem:[#allocation2 + $0x10] sm:$0xff] 0.0
      %50 = vst [vmem:[#allocation2 + $0x18] sm:$0xff] 0.0
    $region25: #{tpu_custom_call.1} parent=1 // pred_fallthru
      _
    %v51 = vld [vmem:[#allocation2] sm:$0xff]
    %v52 = vld [vmem:[#allocation2 + $0x8] sm:$0xff]
    %v53 = vld [vmem:[#allocation2 + $0x10] sm:$0xff]
    %v54 = vld [vmem:[#allocation2 + $0x18] sm:$0xff]
    %v55 = vld [vmem:[#allocation3] sm:$0xff]
    %v56 = vld [vmem:[#allocation3 + $0x8] sm:$0xff]
    %v57 = vld [vmem:[#allocation3 + $0x10] sm:$0xff]
    %v58 = vld [vmem:[#allocation3 + $0x18] sm:$0xff]
    %v59 = vld [vmem:[#allocation6] sm:$0xff]
    %v60 = vld [vmem:[#allocation6 + $0x8] sm:$0xff]
    %v61 = vld [vmem:[#allocation6 + $0x10] sm:$0xff]
    %v62 = vld [vmem:[#allocation6 + $0x18] sm:$0xff]
    %v63 = vld [vmem:[#allocation6 + $0x20] sm:$0xff]
    %v64 = vld [vmem:[#allocation6 + $0x28] sm:$0xff]
    %v65 = vld [vmem:[#allocation6 + $0x30] sm:$0xff]
    %v66 = vld [vmem:[#allocation6 + $0x38] sm:$0xff]
    %v67 = vld [vmem:[#allocation6 + $0x40] sm:$0xff]
    %v68 = vld [vmem:[#allocation6 + $0x48] sm:$0xff]
    %v69 = vld [vmem:[#allocation6 + $0x50] sm:$0xff]
    %v70 = vld [vmem:[#allocation6 + $0x58] sm:$0xff]
    %v71 = vld [vmem:[#allocation6 + $0x60] sm:$0xff]
    %v72 = vld [vmem:[#allocation6 + $0x68] sm:$0xff]
    %v73 = vld [vmem:[#allocation6 + $0x70] sm:$0xff]
    %v74 = vld [vmem:[#allocation6 + $0x78] sm:$0xff]
    %75 = vmatprep.subr.mxu0 0.0
    %76 = vmatpush1.msra.mxu0 %v59
    %77 = vmatprep.subr.mxu0 0.0
    %78 = vmatpush1.msra.mxu0 %v60
    %79 = vmatprep.subr.mxu0 0.0
    %80 = vmatpush1.msra.mxu0 %v61
    %81 = vmatprep.subr.mxu0 0.0
    %82 = vmatpush1.msra.mxu0 %v62
    %83 = vmatprep.subr.mxu0 0.0
    %84 = vmatpush1.msra.mxu0 %v63
    %85 = vmatprep.subr.mxu0 0.0
    %86 = vmatpush1.msra.mxu0 %v64
    %87 = vmatprep.subr.mxu0 0.0
    %88 = vmatpush1.msra.mxu0 %v65
    %89 = vmatprep.subr.mxu0 0.0
    %90 = vmatpush1.msra.mxu0 %v66
    %91 = vmatprep.subr.mxu0 0.0
    %92 = vmatpush1.msra.mxu0 %v67
    %93 = vmatprep.subr.mxu0 0.0
    %94 = vmatpush1.msra.mxu0 %v68
    %95 = vmatprep.subr.mxu0 0.0
    %96 = vmatpush1.msra.mxu0 %v69
    %97 = vmatprep.subr.mxu0 0.0
    %98 = vmatpush1.msra.mxu0 %v70
    %99 = vmatprep.subr.mxu0 0.0
    %100 = vmatpush1.msra.mxu0 %v71
    %101 = vmatprep.subr.mxu0 0.0
    %102 = vmatpush1.msra.mxu0 %v72
    %103 = vmatprep.subr.mxu0 0.0
    %104 = vmatpush1.msra.mxu0 %v73
    %105 = vmatprep.subr.mxu0 0.0
    %106 = vmatpush1.msra.mxu0 %v74
    %107 = vmatprep.subr.mxu0 0.0
    %108 = vmatpush1.msra.mxu0 0.0
    %109 = vmatprep.subr.mxu0 0.0
    %110 = vmatpush1.msra.mxu0 0.0
    %111 = vmatprep.subr.mxu0 0.0
    %112 = vmatpush1.msra.mxu0 0.0
    %113 = vmatprep.subr.mxu0 0.0
    %114 = vmatpush1.msra.mxu0 0.0
    %115 = vmatprep.subr.mxu0 0.0
    %116 = vmatpush1.msra.mxu0 0.0
    %117 = vmatprep.subr.mxu0 0.0
    %118 = vmatpush1.msra.mxu0 0.0
    %119 = vmatprep.subr.mxu0 0.0
    %120 = vmatpush1.msra.mxu0 0.0
    %121 = vmatprep.subr.mxu0 0.0
    %122 = vmatpush1.msra.mxu0 0.0
    %123 = vmatprep.subr.mxu0 0.0
    %124 = vmatpush1.msra.mxu0 0.0
    %125 = vmatprep.subr.mxu0 0.0
    %126 = vmatpush1.msra.mxu0 0.0
    %127 = vmatprep.subr.mxu0 0.0
    %128 = vmatpush1.msra.mxu0 0.0
    %129 = vmatprep.subr.mxu0 0.0
    %130 = vmatpush1.msra.mxu0 0.0
    %131 = vmatprep.subr.mxu0 0.0
    %132 = vmatpush1.msra.mxu0 0.0
    %133 = vmatprep.subr.mxu0 0.0
    %134 = vmatpush1.msra.mxu0 0.0
    %135 = vmatprep.subr.mxu0 0.0
    %136 = vmatpush1.msra.mxu0 0.0
    %137 = vmatprep.subr.mxu0 0.0
    %138 = vmatpush1.msra.mxu0 0.0
    %139 = vmatprep.mubr.f32.mxu0 0.0
    %140 = vmatmul.mubr.f32.gmra.mrb[0].mxu0 %v55
    %v141 = vpop.f32.mrb[0].mxu0
    %v142 = vadd.f32 0.0, %v141
    %v143 = vpop.f32.mrb[0].mxu0
    %144 = vmatprep.mubr.f32.mxu0 0.0
    %145 = vmatmul.mubr.f32.gmra.mrb[0].mxu0 %v56
    %v146 = vpop.f32.mrb[0].mxu0
    %v147 = vadd.f32 0.0, %v146
    %v148 = vpop.f32.mrb[0].mxu0
    %149 = vmatprep.mubr.f32.mxu0 0.0
    %150 = vmatmul.mubr.f32.gmra.mrb[0].mxu0 %v57
    %v151 = vpop.f32.mrb[0].mxu0
    %v152 = vadd.f32 0.0, %v151
    %v153 = vpop.f32.mrb[0].mxu0
    %154 = vmatprep.mubr.f32.mxu0 0.0
    %155 = vmatmul.mubr.f32.gmra.mrb[0].mxu0 %v58
    %v156 = vpop.f32.mrb[0].mxu0
    %v157 = vadd.f32 0.0, %v156
    %v158 = vpop.f32.mrb[0].mxu0
    %159 = vdwg.mxu0
    %v160 = vadd.f32 %v51, %v142
    %v161 = vadd.f32 %v52, %v147
    %v162 = vadd.f32 %v53, %v152
    %v163 = vadd.f32 %v54, %v157
    %164 = vst [vmem:[#allocation2] sm:$0xff] %v160
    %165 = vst [vmem:[#allocation2 + $0x8] sm:$0xff] %v161
    %166 = vst [vmem:[#allocation2 + $0x10] sm:$0xff] %v162
    %167 = vst [vmem:[#allocation2 + $0x18] sm:$0xff] %v163
    // Predicated region
    $region26: #{tpu_custom_call.1} parent=1 // pred_check
      %p168 = pneg %p43
    $region27: #{tpu_custom_call.1} parent=1 // pred_check_branch
      %170 = sbr.rel (%p168) target = $region29
    $region28: #{tpu_custom_call.1} parent=1 // pred_region
      %v171 = vld [vmem:[#allocation2] sm:$0xff]
      %v172 = vld [vmem:[#allocation2 + $0x8] sm:$0xff]
      %v173 = vld [vmem:[#allocation2 + $0x10] sm:$0xff]
      %v174 = vld [vmem:[#allocation2 + $0x18] sm:$0xff]
      %v175 = vld [vmem:[%s2] sm:$0x1]
      %v177 = vlaneseq
      %v178 = vshrl.u32 %v177, 7
      %v179 = vsub.s32 0, %v178
      %v180 = vrot.slane %v175, %v179
      %v182 = vadd.f32 %v171, %v180
      %v183 = vadd.f32 %v172, %v180
      %v184 = vadd.f32 %v173, %v180
      %v185 = vadd.f32 %v174, %v180
      %186 = vst [vmem:[#allocation8] sm:$0xff] %v182
      %187 = vst [vmem:[#allocation8 + $0x8] sm:$0xff] %v183
      %188 = vst [vmem:[#allocation8 + $0x10] sm:$0xff] %v184
      %189 = vst [vmem:[#allocation8 + $0x18] sm:$0xff] %v185
    $region29: #{tpu_custom_call.1} parent=1 // pred_fallthru
      _
    // Predicated region
    $region30: #{tpu_custom_call.1} parent=1 // pred_check
      _
    $region31: #{tpu_custom_call.1} parent=1 // pred_check_branch
      %191 = sbr.rel (0) target = $region33
    $region32: #{tpu_custom_call.1} parent=1 // pred_region
      %s193 = ssub.s32 512, 512
      %194 = vsyncadd [#allocation5], %s193
      %s195 = sshll.u32 [#allocation8], 4
      %s196 = int_to_ptr.vmem [resolvable:$true] %s195
      %201 = dma.vmem_to_hbm [thread:$0]  %s196, 512, %s3, [#allocation5], 128, 128, 8
    $region33: #{tpu_custom_call.1} parent=1 // pred_fallthru
      _
    // Predicated region
    $region34: #{tpu_custom_call.1} parent=1 // pred_check
      _
    $region35: #{tpu_custom_call.1} parent=1 // pred_check_branch
      %203 = sbr.rel (0) target = $region37
    $region36: #{tpu_custom_call.1} parent=1 // pred_region
      %204 = dma.done [#allocation5], 512
    $region37: #{tpu_custom_call.1} parent=1 // pred_fallthru
      _
    %205 = vsyncpa [#allocation4], 1
    %206 = vsyncpa [#allocation7], 1
    %207 = vsyncpa [#allocation5], 1

</llo_original>
